<compile_context>
chip_gen: v6e
topology: v6e:2x2x1
jax: 0.10.0
libtpu: 0.0.40
codegen_flags: <defaults>
</compile_context>

<pallas_src>
import functools

import jax
import jax.numpy as jnp
from jax.experimental import pallas as pl
from jax.experimental.pallas import tpu as pltpu


def _rmsnorm_kernel(x_ref, w_ref, o_ref, *, eps: float, scale_in_input_dtype: bool):
    # x_ref: (block_rows, hidden), w_ref: (1, hidden), o_ref: (block_rows, hidden)
    x = x_ref[...]
    x32 = x.astype(jnp.float32)
    var = jnp.mean(x32 * x32, axis=-1, keepdims=True)      # (block_rows, 1) f32
    inv = jax.lax.rsqrt(var + eps)                          # EUP slot
    if scale_in_input_dtype:
        # Opt-in low-VPU path (keeps v7x DMA-bound): square/mean/rsqrt stay f32,
        # final scale runs in the input dtype.
        o_ref[...] = ((x * inv.astype(x.dtype)) * w_ref[...]).astype(o_ref.dtype)
    else:
        w32 = w_ref[...].astype(jnp.float32)                # (1, hidden)
        o_ref[...] = (w32 * (x32 * inv)).astype(o_ref.dtype)


def _generation_params():
    """(num_tensorcores_sharing_grid, target_block_bytes, vmem_limit_cap)."""
    try:
        kind = jax.devices()[0].device_kind.lower()
    except Exception:  # pragma: no cover - defensive
        kind = ""
    if "7" in kind:                       # v7x: 2 TCs/chip, 64 MiB VMEM per TC
        return 2, 4 << 20, 48 << 20
    if "v4" in kind or "v5p" in kind:     # megacore: 2 TCs, 128 MiB VMEM
        return 2, 6 << 20, 96 << 20
    if "v5" in kind or "v6" in kind:      # v5e / v6e: 1 TC, 128 MiB VMEM
        return 1, 6 << 20, 96 << 20
    return 1, 4 << 20, 48 << 20           # unknown: conservative


def _row_align(itemsize: int) -> int:
    if itemsize == 1:
        return 32          # int8 / fp8 sublane packing
    if itemsize == 2:
        return 16          # bf16 / fp16 sublane packing
    return 8               # f32


def _balanced_split(rows: int, align_pref: int, num_steps: int) -> int:
    """block_rows giving ~num_steps evenly sized, sublane-aligned steps."""
    cands = []
    for align in (align_pref, 8):
        br = align * (-(-rows // (num_steps * align)))      # ceil to multiple of align
        br = max(align, min(br, rows))
        steps = -(-rows // br)
        last = rows - (steps - 1) * br
        cands.append((last / br, align, br))                 # balance first, then align
    cands.sort(reverse=True)
    return cands[0][2]


def _pick_block_rows(rows: int, hidden: int, itemsize: int,
                     num_tc: int, target_block_bytes: int) -> int:
    align = _row_align(itemsize)
    row_bytes = max(1, hidden * itemsize)
    br = max(align, target_block_bytes // row_bytes)
    br = max(align, (br // align) * align)

    if br >= rows:
        # Whole problem fits one block.
        if num_tc <= 1 or rows <= 2 * align:
            return rows                    # single full-extent block, no wasted split
        # 2-TC chip: split into num_tc balanced steps so both cores work.
        return _balanced_split(rows, align, num_tc)

    # Multi-step grid: if the step count is small and uneven across cores,
    # rebalance so neither core idles on a runt tail.
    steps = -(-rows // br)
    if num_tc > 1 and steps < 8 and steps % num_tc != 0:
        target_steps = num_tc * (-(-steps // num_tc))
        return _balanced_split(rows, align, target_steps)
    return br


def rmsnorm(x: jax.Array, weight: jax.Array, eps: float = 1e-5,
            block_rows: int | None = None,
            vmem_limit_bytes: int | None = None,
            scale_in_input_dtype: bool = False) -> jax.Array:
    """RMSNorm over the last axis of x; weight has shape (hidden,)."""
    orig_shape = x.shape
    hidden = orig_shape[-1]
    assert weight.shape == (hidden,)

    x2d = x.reshape(-1, hidden)
    rows = x2d.shape[0]
    w2d = weight.reshape(1, hidden)
    itemsize = x2d.dtype.itemsize

    num_tc, target_block_bytes, vmem_cap = _generation_params()

    if block_rows is None:
        block_rows = _pick_block_rows(rows, hidden, itemsize, num_tc,
                                      target_block_bytes)
    block_rows = min(block_rows, rows)
    if block_rows < rows:
        # Sub-extent blocks: keep the sublane axis packed for the dtype
        # (8 f32 / 16 bf16 / 32 int8); full-extent blocks stay exact.
        align = _row_align(itemsize)
        a = align if block_rows >= align else 8
        block_rows = max(8, (block_rows // a) * a)

    if vmem_limit_bytes is None:
        # Double-buffered in + out blocks, ~3 f32-width intermediates, headroom.
        block_bytes = block_rows * hidden * itemsize
        f32_bytes = block_rows * hidden * 4
        need = 4 * block_bytes + 3 * f32_bytes + (4 << 20)
        vmem_limit_bytes = max(32 << 20, min(vmem_cap, need))

    grid = (pl.cdiv(rows, block_rows),)            # partial last block is masked

    out = pl.pallas_call(
        functools.partial(_rmsnorm_kernel, eps=eps,
                          scale_in_input_dtype=scale_in_input_dtype),
        out_shape=jax.ShapeDtypeStruct((rows, hidden), x.dtype),
        grid_spec=pltpu.PrefetchScalarGridSpec(
            num_scalar_prefetch=0,
            grid=grid,
            in_specs=[
                pl.BlockSpec((block_rows, hidden), lambda i: (i, 0)),
                pl.BlockSpec((1, hidden), lambda i: (0, 0)),   # weight fetched once
            ],
            out_specs=pl.BlockSpec((block_rows, hidden), lambda i: (i, 0)),
        ),
        compiler_params=pltpu.CompilerParams(
            dimension_semantics=("parallel",),
            vmem_limit_bytes=vmem_limit_bytes,
        ),
    )(x2d, w2d)

    return out.reshape(orig_shape)


def rmsnorm_ref(x, weight, eps=1e-5):
    x32 = x.astype(jnp.float32)
    var = jnp.mean(x32 * x32, axis=-1, keepdims=True)
    return (weight.astype(jnp.float32) * (x32 * jax.lax.rsqrt(var + eps))
            ).astype(x.dtype)


if __name__ == "__main__":
    key = jax.random.PRNGKey(0)
    kx, kw, kx2, kw2, kx3, kw3 = jax.random.split(key, 6)

    # Case 1: ChatGLM2-style small shape (seq, batch, hidden), bf16, auto tiling.
    seq, batch, hidden = 8, 2, 128
    x = jax.random.normal(kx, (seq, batch, hidden), dtype=jnp.float32
                          ).astype(jnp.bfloat16)
    weight = (1.0 + 0.01 * jax.random.normal(kw, (hidden,), dtype=jnp.float32)
              ).astype(jnp.bfloat16)
    out = jax.block_until_ready(rmsnorm(x, weight, eps=1e-5))
    ref = rmsnorm_ref(x, weight, eps=1e-5)
    assert out.shape == x.shape and out.dtype == x.dtype
    err = jnp.max(jnp.abs(out.astype(jnp.float32) - ref.astype(jnp.float32)))
    assert float(err) < 2e-2, f"case1 max abs err {float(err)}"

    # Case 2: forced multi-step grid with a partial (masked) last block, bf16.
    seq2, batch2, hidden2 = 25, 8, 256
    x2 = jax.random.normal(kx2, (seq2, batch2, hidden2), dtype=jnp.float32
                           ).astype(jnp.bfloat16)
    w2 = (1.0 + 0.01 * jax.random.normal(kw2, (hidden2,), dtype=jnp.float32)
          ).astype(jnp.bfloat16)
    out2 = jax.block_until_ready(rmsnorm(x2, w2, eps=1e-5, block_rows=64))
    ref2 = rmsnorm_ref(x2, w2, eps=1e-5)
    err2 = jnp.max(jnp.abs(out2.astype(jnp.float32) - ref2.astype(jnp.float32)))
    assert float(err2) < 2e-2, f"case2 max abs err {float(err2)}"

    # Case 3: float32 path, small hidden, non-multiple-of-8 row count
    # (full-extent block is allowed to be unaligned).
    x3 = jax.random.normal(kx3, (4, 3, 32), dtype=jnp.float32)
    w3 = 1.0 + 0.01 * jax.random.normal(kw3, (32,), dtype=jnp.float32)
    out3 = jax.block_until_ready(rmsnorm(x3, w3, eps=1e-5))
    ref3 = rmsnorm_ref(x3, w3, eps=1e-5)
    err3 = jnp.max(jnp.abs(out3 - ref3))
    assert float(err3) < 1e-5, f"case3 max abs err {float(err3)}"

    print("KERNEL_OK")
</pallas_src>

<mosaic_0001>
module attributes {stable_mosaic.version = 11 : i64} {
  func.func @_rmsnorm_kernel(%arg0: i32, %arg1: memref<16x128xbf16, #tpu.memory_space<vmem>>, %arg2: memref<1x128xbf16, #tpu.memory_space<vmem>>, %arg3: memref<16x128xbf16, #tpu.memory_space<vmem>>) attributes {dimension_semantics = [#tpu.dimension_semantics<parallel>], iteration_bounds = array<i64: 1>, scalar_prefetch = 0 : i64, scratch_operands = 0 : i64, tpu.core_type = #tpu.core_type<tc>, window_params = [{transform_indices = @transform_0, window_bounds = array<i64: 16, 128>}, {pipeline_mode = #tpu.pipeline_mode<synchronous>, transform_indices = @transform_1, window_bounds = array<i64: 1, 128>}, {transform_indices = @transform_2, window_bounds = array<i64: 16, 128>}]} {
    %c0 = arith.constant 0 : index
    %c0_0 = arith.constant 0 : index
    %0 = vector.load %arg1[%c0, %c0_0] : memref<16x128xbf16, #tpu.memory_space<vmem>>, vector<16x128xbf16>
    %1 = arith.extf %0 : vector<16x128xbf16> to vector<16x128xf32>
    %2 = arith.mulf %1, %1 : vector<16x128xf32>
    %cst = arith.constant dense<0.000000e+00> : vector<16xf32>
    %3 = vector.multi_reduction <add>, %2, %cst [1] : vector<16x128xf32> to vector<16xf32>
    %4 = vector.shape_cast %3 : vector<16xf32> to vector<16x1xf32>
    %cst_1 = arith.constant 1.280000e+02 : f32
    %5 = vector.broadcast %cst_1 : f32 to vector<16x1xf32>
    %6 = arith.divf %4, %5 : vector<16x1xf32>
    %cst_2 = arith.constant 9.99999974E-6 : f32
    %7 = vector.broadcast %cst_2 : f32 to vector<16x1xf32>
    %8 = arith.addf %6, %7 : vector<16x1xf32>
    %9 = math.rsqrt %8 : vector<16x1xf32>
    %c0_3 = arith.constant 0 : index
    %c0_4 = arith.constant 0 : index
    %10 = vector.load %arg2[%c0_3, %c0_4] : memref<1x128xbf16, #tpu.memory_space<vmem>>, vector<1x128xbf16>
    %11 = arith.extf %10 : vector<1x128xbf16> to vector<1x128xf32>
    %12 = vector.broadcast %9 : vector<16x1xf32> to vector<16x128xf32>
    %13 = arith.mulf %1, %12 : vector<16x128xf32>
    %14 = vector.broadcast %11 : vector<1x128xf32> to vector<16x128xf32>
    %15 = arith.mulf %14, %13 : vector<16x128xf32>
    %16 = arith.truncf %15 : vector<16x128xf32> to vector<16x128xbf16>
    %c0_5 = arith.constant 0 : index
    %c0_6 = arith.constant 0 : index
    %17 = vector.load %arg3[%c0_5, %c0_6] : memref<16x128xbf16, #tpu.memory_space<vmem>>, vector<16x128xbf16>
    tpu.vector_store %arg3[%c0_5, %c0_6], %16 {strides = array<i32>} : memref<16x128xbf16, #tpu.memory_space<vmem>>, vector<16x128xbf16>,
    return
  }
  func.func @transform_0(%arg0: i32) -> (i32, i32) {
    %c0_i32 = arith.constant 0 : i32
    %c0_i32_0 = arith.constant 0 : i32
    return %arg0, %c0_i32 : i32, i32
  }
  func.func @transform_1(%arg0: i32) -> (i32, i32) {
    %c0_i32 = arith.constant 0 : i32
    %c0_i32_0 = arith.constant 0 : i32
    %c0_i32_1 = arith.constant 0 : i32
    return %c0_i32, %c0_i32_0 : i32, i32
  }
  func.func @transform_2(%arg0: i32) -> (i32, i32) {
    %c0_i32 = arith.constant 0 : i32
    %c0_i32_0 = arith.constant 0 : i32
    return %arg0, %c0_i32 : i32, i32
  }
}

</mosaic_0001>

<llo_original>
// kernel: tpu_custom_call.1
$region0: #{tpu_custom_call.1}
  #allocation0 [shape = 'u32[]', space=smem, size = 0x4, offset = 0x4, fixed_abs, tag = 'smem constant byte address 0x4 - core index']
  #allocation1 [shape = 'u32[144,128]{1,0:T(1,128)}', space=vmem, size = 0x12000, scoped, tag = 'internal scratch']
  %s0 = inlined_call_operand.hbm [shape: bf16[16,128], index: 0, kind: input, shape index: {}]
  %s1 = inlined_call_operand.vmem [shape: bf16[1,128], index: 1, kind: input, shape index: {}]
  %s2 = inlined_call_operand.hbm [shape: bf16[16,128], index: 2, kind: output, shape index: {}]
  %s3 = sld [smem:[#allocation0]]
  $region22: #{tpu_custom_call.1} parent=0
    _
  %s5 = ssub.s32 1, %s3
  %s6 = scalar_select 0, %s5, %s3
  $region1: #{tpu_custom_call.1} parent=0
    #allocation2 [shape = 'u8[4096]{0}', space=vmem, size = 0x1000, scoped, tag = 'input window, operand 0, single buffered']
    #allocation3 [shape = 's32[1]{0}', space=sflag, size = 0x4, scoped, tag = 'scoped memory for tpu_custom_call.1']
    #allocation4 [shape = 's32[1]{0}', space=sflag, size = 0x4, scoped, tag = 'scoped memory for tpu_custom_call.1']
    #allocation5 [shape = 'u8[4096]{0}', space=vmem, size = 0x1000, scoped, tag = 'output window, operand 0, single buffered']
    %7 = vsyncpa [#allocation3], 0
    %8 = vsyncpa [#allocation4], 0
    // Predicated region
    $region2: #{tpu_custom_call.1} parent=1 // pred_check
      _
    $region3: #{tpu_custom_call.1} parent=1 // pred_check_branch
      %10 = sbr.rel (0) target = $region5
    $region4: #{tpu_custom_call.1} parent=1 // pred_region
      %s12 = ssub.s32 128, 128
      %13 = vsyncadd [#allocation3], %s12
      %s14 = sshll.u32 [#allocation2], 4
      %s15 = int_to_ptr.vmem [resolvable:$true] %s14
      %20 = dma.hbm_to_vmem [thread:$0]  %s0, 128, %s15, [#allocation3], 64, 64, 4
    $region5: #{tpu_custom_call.1} parent=1 // pred_fallthru
      _
    // Predicated region
    $region6: #{tpu_custom_call.1} parent=1 // pred_check
      _
    $region7: #{tpu_custom_call.1} parent=1 // pred_check_branch
      %22 = sbr.rel (0) target = $region9
    $region8: #{tpu_custom_call.1} parent=1 // pred_region
      _
    $region9: #{tpu_custom_call.1} parent=1 // pred_fallthru
      _
    // Predicated region
    $region10: #{tpu_custom_call.1} parent=1 // pred_check
      _
    $region11: #{tpu_custom_call.1} parent=1 // pred_check_branch
      %24 = sbr.rel (0) target = $region13
    $region12: #{tpu_custom_call.1} parent=1 // pred_region
      %25 = dma.done [#allocation3], 128
    $region13: #{tpu_custom_call.1} parent=1 // pred_fallthru
      _
    %v26 = vld [vmem:[#allocation2] sm:$0xf]
    %v27 = vld [vmem:[#allocation2 + $0x4] sm:$0xf]
    %v28 = vunpack.c.l.bf16 %v26
    %v29 = vunpack.c.l.bf16 %v27
    %v30 = vmul.f32 %v28, %v28
    %v31 = vmul.f32 %v29, %v29
    %32 = vadd.xlane.f32.xlu0 %v30
    %v33 = vpop.xlane.xlu0 %32
    %34 = vadd.xlane.f32.xlu0 %v31
    %v35 = vpop.xlane.xlu0 %34
    %v36 = vrcp.pop 128.0
    %v37 = vmul.f32 %v33, %v36
    %v38 = vmul.f32 %v35, %v36
    %v39 = vadd.f32 %v37, 1e-05
    %v40 = vadd.f32 %v38, 1e-05
    %v41 = vrsqrt.pop %v39
    %v42 = vrsqrt.pop %v40
    %v43 = vld [vmem:[%s1] sm:$0x1]
    %v44 = vunpack.c.l.bf16 %v43
    %v45 = vmul.f32 %v28, %v41
    %v46 = vmul.f32 %v29, %v42
    %v47 = vlaneseq
    %v48 = vshrl.u32 %v47, 7
    %v49 = vsub.s32 0, %v48
    %v50 = vrot.slane %v44, %v49
    %v51 = vmul.f32 %v50, %v45
    %v52 = vmul.f32 %v50, %v46
    %v53 = vpack.c.bf16 %v52, %v51
    %v55 = vunpack.c.l.b16 %v53
    %v56 = vunpack.c.h.b16 %v53
    %v57 = vpack.c.b16 %v55, %v55
    %v58 = vpack.c.b16 %v56, %v56
    %61 = vst [vmem:[#allocation5] sm:$0xf] %v57
    %62 = vst [vmem:[#allocation5 + $0x4] sm:$0xf] %v58
    // Predicated region
    $region14: #{tpu_custom_call.1} parent=1 // pred_check
      _
    $region15: #{tpu_custom_call.1} parent=1 // pred_check_branch
      %64 = sbr.rel (0) target = $region17
    $region16: #{tpu_custom_call.1} parent=1 // pred_region
      %s66 = ssub.s32 128, 128
      %67 = vsyncadd [#allocation4], %s66
      %s68 = sshll.u32 [#allocation5], 4
      %s69 = int_to_ptr.vmem [resolvable:$true] %s68
      %74 = dma.vmem_to_hbm [thread:$0]  %s69, 128, %s2, [#allocation4], 64, 64, 4
    $region17: #{tpu_custom_call.1} parent=1 // pred_fallthru
      _
    // Predicated region
    $region18: #{tpu_custom_call.1} parent=1 // pred_check
      _
    $region19: #{tpu_custom_call.1} parent=1 // pred_check_branch
      %76 = sbr.rel (0) target = $region21
    $region20: #{tpu_custom_call.1} parent=1 // pred_region
      %77 = dma.done [#allocation4], 128
    $region21: #{tpu_custom_call.1} parent=1 // pred_fallthru
      _
    %78 = vsyncpa [#allocation3], 1
    %79 = vsyncpa [#allocation4], 1

</llo_original>
